<compile_context>
chip_gen: v6e
topology: v6e:2x2x1
jax: 0.10.0
libtpu: 0.0.40
codegen_flags: <defaults>
</compile_context>

<pallas_src>
import functools

import jax
import jax.numpy as jnp
from jax import lax
from jax.experimental import pallas as pl
from jax.experimental.pallas import tpu as pltpu


def _pick_tile(n, target):
    """Largest tile <= target that divides n and is a multiple of 8 (or n itself)."""
    if n <= target:
        return n
    for t in range(target, 7, -1):
        if n % t == 0 and t % 8 == 0:
            return t
    return n


def _default_tile_targets():
    """v5e: 128-deep MXU + lowest HBM BW -> 128; v6e/v7x: 256-deep MXU -> 256."""
    try:
        kind = jax.devices()[0].device_kind.lower()
    except Exception:
        kind = ""
    if "v5 lite" in kind or "v5lite" in kind or "v5e" in kind:
        return 128, 128
    return 256, 256


def _vmem_limit_bytes(est_bytes):
    """Override default scoped-VMEM limit only when the tile plan needs more."""
    if est_bytes <= 32 * 1024 * 1024:
        return None
    cap = 128 * 1024 * 1024
    try:
        cap = pltpu.get_tpu_info().vmem_capacity_bytes
    except Exception:
        pass
    return int(min(est_bytes * 5 // 4, cap))


def _compiler_params(dim_sem, est_vmem_bytes):
    limit = _vmem_limit_bytes(est_vmem_bytes)
    if limit is None:
        return pltpu.CompilerParams(dimension_semantics=dim_sem)
    return pltpu.CompilerParams(dimension_semantics=dim_sem, vmem_limit_bytes=limit)


# --------------------------- kernel 1: fused QKV ----------------------------

def _qkv_proj_kernel(x_ref, w_qkv_ref, q_ref, kv_ref, *, d_out, scale):
    # x_ref: (1, tr, d_in); w_qkv_ref: (d_in, 3*d_out)
    x = x_ref[0]
    qkv = jnp.dot(x, w_qkv_ref[...], preferred_element_type=jnp.float32)  # (tr, 3*d_out)
    # Fold 1/sqrt(head_dim) into q once here instead of scaling every score tile.
    q_ref[0] = (qkv[:, :d_out] * scale).astype(q_ref.dtype)
    kv_ref[0] = qkv[:, d_out:].astype(kv_ref.dtype)


# --------------------- kernel 2: flash attention + Wo -----------------------

def _flash_attn_kernel(q_ref, kv_ref, w_o_ref, b_o_ref, o_ref,
                       m_scr, l_scr, acc_scr,
                       *, num_heads, head_dim, tq, tk):
    d_out = num_heads * head_dim
    qi = pl.program_id(1)
    ki = pl.program_id(2)

    @pl.when(ki == 0)
    def _init():
        m_scr[...] = jnp.full_like(m_scr, -1e30)
        l_scr[...] = jnp.zeros_like(l_scr)
        acc_scr[...] = jnp.zeros_like(acc_scr)

    row0 = qi * tq
    col0 = ki * tk

    def _attend(masked):
        if masked:
            rows = row0 + lax.broadcasted_iota(jnp.int32, (tq, tk), 0)
            cols = col0 + lax.broadcasted_iota(jnp.int32, (tq, tk), 1)
            bias = jnp.where(rows >= cols, 0.0, -1e30)   # finite: no inf-inf NaN
        # Per-head ref slices: only one head's operands live at a time.
        for h in range(num_heads):
            sl = slice(h * head_dim, (h + 1) * head_dim)
            q_h = q_ref[0, :, sl]                                    # (tq, hd), pre-scaled
            k_h = kv_ref[0, :, sl]                                   # (tk, hd)
            # q @ k^T without materializing a transpose: contract last axes.
            s = lax.dot_general(q_h, k_h, (((1,), (1,)), ((), ())),
                                preferred_element_type=jnp.float32)  # (tq, tk)
            if masked:
                s = s + bias
            m_prev = m_scr[h]                                        # (tq, 1)
            m_new = jnp.maximum(m_prev, jnp.max(s, axis=-1, keepdims=True))
            alpha = jnp.exp(m_prev - m_new)
            p = jnp.exp(s - m_new)
            l_scr[h] = alpha * l_scr[h] + jnp.sum(p, axis=-1, keepdims=True)
            v_h = kv_ref[0, :, d_out + h * head_dim:d_out + (h + 1) * head_dim]
            acc_scr[h] = alpha * acc_scr[h] + lax.dot_general(
                p.astype(v_h.dtype), v_h, (((1,), (0,)), ((), ())),
                preferred_element_type=jnp.float32)                  # (tq, hd)
            m_scr[h] = m_new

    # Strictly-visible interior tiles skip all mask work; only tiles that
    # straddle the diagonal build and add the bias.  Future tiles skip compute
    # entirely (and, via the clamped kv index_map, are never DMA'd).
    interior = col0 + (tk - 1) <= row0
    straddle = jnp.logical_and(col0 <= row0 + (tq - 1),
                               jnp.logical_not(interior))

    @pl.when(interior)
    def _interior():
        _attend(False)

    @pl.when(straddle)
    def _straddle():
        _attend(True)

    @pl.when(ki == pl.num_programs(2) - 1)
    def _finalize():
        # Per-head normalized context @ per-head rows of W_o, summed in f32:
        # mathematically identical to ctx @ W_o, no concat/transpose needed.
        out = jnp.zeros((tq, d_out), jnp.float32)
        for h in range(num_heads):
            inv_l = pl.reciprocal(l_scr[h], approx=False)            # once per q tile
            ctx_h = (acc_scr[h] * inv_l).astype(w_o_ref.dtype)       # (tq, hd)
            out = out + lax.dot_general(
                ctx_h, w_o_ref[h * head_dim:(h + 1) * head_dim, :],
                (((1,), (0,)), ((), ())), preferred_element_type=jnp.float32)
        o_ref[0] = (out + b_o_ref[...]).astype(o_ref.dtype)


# ------------------------------- wrapper ------------------------------------

def multi_head_attention(x, w_q, w_k, w_v, w_o, b_o, *, num_heads,
                         compute_dtype=jnp.bfloat16, q_tile=None, kv_tile=None):
    """x: (B, T, d_in); w_q/w_k/w_v: (d_in, d_out); w_o: (d_out, d_out); b_o: (d_out,).
    Weight matrices are stored (in, out), i.e. transposed vs nn.Linear.weight."""
    B, T, d_in = x.shape
    d_out = w_q.shape[1]
    assert d_out % num_heads == 0
    head_dim = d_out // num_heads
    scale = 1.0 / (head_dim ** 0.5)
    out_dtype = x.dtype

    q_tgt, kv_tgt = _default_tile_targets()
    if q_tile is None:
        q_tile = q_tgt
    if kv_tile is None:
        kv_tile = kv_tgt

    cd = jnp.dtype(compute_dtype).itemsize
    od = jnp.dtype(out_dtype).itemsize

    # bf16 on the MXU halves HBM/VMEM bytes; softmax state / accumulation stay f32.
    x_c = x.astype(compute_dtype)
    w_qkv = jnp.concatenate([w_q, w_k, w_v], axis=1).astype(compute_dtype)  # (d_in, 3*d_out)
    w_o_c = w_o.astype(compute_dtype)
    b_o2 = b_o.reshape(1, d_out).astype(jnp.float32)

    # ---- kernel 1: fused QKV projection -------------------------------------
    tr = _pick_tile(T, 256)
    k1_vmem = 2 * (tr * d_in + d_in * 3 * d_out + tr * 3 * d_out) * cd
    k1_cost = pl.CostEstimate(
        flops=2 * B * T * d_in * 3 * d_out,
        transcendentals=0,
        bytes_accessed=(B * T * d_in + d_in * 3 * d_out + B * T * 3 * d_out) * cd)
    proj = pl.pallas_call(
        functools.partial(_qkv_proj_kernel, d_out=d_out, scale=scale),
        out_shape=(jax.ShapeDtypeStruct((B, T, d_out), compute_dtype),
                   jax.ShapeDtypeStruct((B, T, 2 * d_out), compute_dtype)),
        grid_spec=pltpu.PrefetchScalarGridSpec(
            num_scalar_prefetch=0,
            grid=(B, T // tr),
            in_specs=[
                pl.BlockSpec((1, tr, d_in), lambda b, r: (b, r, 0)),       # x
                pl.BlockSpec((d_in, 3 * d_out), lambda b, r: (0, 0)),      # [Wq|Wk|Wv]
            ],
            out_specs=[
                pl.BlockSpec((1, tr, d_out), lambda b, r: (b, r, 0)),      # q (scaled)
                pl.BlockSpec((1, tr, 2 * d_out), lambda b, r: (b, r, 0)),  # [k|v]
            ],
        ),
        compiler_params=_compiler_params(("parallel", "parallel"), k1_vmem),
        cost_estimate=k1_cost,
    )
    q, kv = proj(x_c, w_qkv)

    # ---- kernel 2: flash-style causal attention + output projection ---------
    tq = _pick_tile(T, q_tile)
    tk = _pick_tile(T, kv_tile)

    # Clamp the kv block index to the last visible (diagonal) block for this
    # q tile: fully-masked future kv tiles repeat the previous block index, so
    # Pallas skips their HBM DMA entirely (compute is skipped by the pl.when).
    def kv_index_map(b, i, j):
        return (b, jnp.minimum(j, (i * tq + tq - 1) // tk), 0)

    k2_vmem = (2 * (tq * d_out + tk * 2 * d_out + d_out * d_out + d_out) * cd
               + 2 * tq * d_out * od
               + num_heads * tq * (head_dim + 2) * 4)
    k2_cost = pl.CostEstimate(
        flops=4 * B * T * T * d_out + 2 * B * T * d_out * d_out,
        transcendentals=B * T * T * num_heads,
        bytes_accessed=(B * T * 3 * d_out * cd + d_out * d_out * cd
                        + B * T * d_out * od))
    attn = pl.pallas_call(
        functools.partial(_flash_attn_kernel, num_heads=num_heads,
                          head_dim=head_dim, tq=tq, tk=tk),
        out_shape=jax.ShapeDtypeStruct((B, T, d_out), out_dtype),
        grid_spec=pltpu.PrefetchScalarGridSpec(
            num_scalar_prefetch=0,
            grid=(B, T // tq, T // tk),
            in_specs=[
                pl.BlockSpec((1, tq, d_out), lambda b, i, j: (b, i, 0)),      # q tile
                pl.BlockSpec((1, tk, 2 * d_out), kv_index_map),               # k|v tile
                pl.BlockSpec((d_out, d_out), lambda b, i, j: (0, 0)),         # W_o
                pl.BlockSpec((1, d_out), lambda b, i, j: (0, 0)),             # b_o
            ],
            out_specs=pl.BlockSpec((1, tq, d_out), lambda b, i, j: (b, i, 0)),
            scratch_shapes=[
                pltpu.VMEM((num_heads, tq, 1), jnp.float32),        # running max m
                pltpu.VMEM((num_heads, tq, 1), jnp.float32),        # running sum l
                pltpu.VMEM((num_heads, tq, head_dim), jnp.float32),  # ctx accumulator
            ],
        ),
        compiler_params=_compiler_params(("parallel", "parallel", "arbitrary"),
                                         k2_vmem),
        cost_estimate=k2_cost,
    )
    return attn(q, kv, w_o_c, b_o2)


# ------------------------------ reference -----------------------------------

def _reference(x, w_q, w_k, w_v, w_o, b_o, num_heads):
    """Pure-JAX reference mirroring the PyTorch forward (dropout=0)."""
    B, T, d_in = x.shape
    d_out = w_q.shape[1]
    hd = d_out // num_heads
    q = (x @ w_q).reshape(B, T, num_heads, hd).transpose(0, 2, 1, 3)
    k = (x @ w_k).reshape(B, T, num_heads, hd).transpose(0, 2, 1, 3)
    v = (x @ w_v).reshape(B, T, num_heads, hd).transpose(0, 2, 1, 3)
    s = jnp.einsum("bhqd,bhkd->bhqk", q, k)
    mask = jnp.triu(jnp.ones((T, T), bool), k=1)
    s = jnp.where(mask[None, None], -jnp.inf, s)
    w = jax.nn.softmax(s / (hd ** 0.5), axis=-1)
    ctx = jnp.einsum("bhqk,bhkd->bhqd", w, v).transpose(0, 2, 1, 3).reshape(B, T, d_out)
    return ctx @ w_o + b_o


if __name__ == "__main__":
    # Small, module-consistent shapes: batch=2, seq=8, d_in=32, d_out=32, heads=4
    B, T, D_IN, D_OUT, NUM_HEADS = 2, 8, 32, 32, 4
    DROPOUT = 0.0          # identity in forward (inference)

    key = jax.random.PRNGKey(0)
    kx, kq, kk, kv_, ko, kb = jax.random.split(key, 6)

    def init(k, shape, fan_in):
        bound = 1.0 / (fan_in ** 0.5)
        return jax.random.uniform(k, shape, jnp.float32, -bound, bound)

    x = jax.random.normal(kx, (B, T, D_IN), jnp.float32)
    w_q = init(kq, (D_IN, D_OUT), D_IN)      # W_query (qkv_bias=False)
    w_k = init(kk, (D_IN, D_OUT), D_IN)      # W_key
    w_v = init(kv_, (D_IN, D_OUT), D_IN)     # W_value
    w_o = init(ko, (D_OUT, D_OUT), D_OUT)    # out_proj weight, (in, out) layout
    b_o = init(kb, (D_OUT,), D_OUT)          # out_proj bias

    ref = _reference(x, w_q, w_k, w_v, w_o, b_o, NUM_HEADS)

    # Default (bf16-on-MXU) path — the production perf configuration.
    out_bf16 = multi_head_attention(x, w_q, w_k, w_v, w_o, b_o, num_heads=NUM_HEADS)
    out_bf16 = jax.block_until_ready(out_bf16)
    if not jnp.allclose(out_bf16, ref, atol=6e-2, rtol=6e-2):
        raise AssertionError("Pallas MHA (bf16) does not match reference")

    # f32-MXU path for tighter parity with the PyTorch reference.
    out_f32 = multi_head_attention(x, w_q, w_k, w_v, w_o, b_o, num_heads=NUM_HEADS,
                                   compute_dtype=jnp.float32)
    out_f32 = jax.block_until_ready(out_f32)
    if not jnp.allclose(out_f32, ref, atol=2e-3, rtol=2e-3):
        raise AssertionError("Pallas MHA (f32) does not match reference")

    print("KERNEL_OK")
</pallas_src>

<mosaic_0001>
module attributes {stable_mosaic.version = 11 : i64} {
  func.func @_qkv_proj_kernel(%arg0: i32, %arg1: i32, %arg2: memref<1x8x32xbf16, #tpu.memory_space<vmem>>, %arg3: memref<32x96xbf16, #tpu.memory_space<vmem>>, %arg4: memref<1x8x32xbf16, #tpu.memory_space<vmem>>, %arg5: memref<1x8x64xbf16, #tpu.memory_space<vmem>>) attributes {dimension_semantics = [#tpu.dimension_semantics<parallel>, #tpu.dimension_semantics<parallel>], iteration_bounds = array<i64: 2, 1>, scalar_prefetch = 0 : i64, scratch_operands = 0 : i64, tpu.core_type = #tpu.core_type<tc>, window_params = [{transform_indices = @transform_0, window_bounds = array<i64: 1, 8, 32>}, {pipeline_mode = #tpu.pipeline_mode<synchronous>, transform_indices = @transform_1, window_bounds = array<i64: 32, 96>}, {transform_indices = @transform_2, window_bounds = array<i64: 1, 8, 32>}, {transform_indices = @transform_3, window_bounds = array<i64: 1, 8, 64>}]} {
    %c0 = arith.constant 0 : index
    %c0_0 = arith.constant 0 : index
    %c0_1 = arith.constant 0 : index
    %0 = vector.load %arg2[%c0, %c0_0, %c0_1] : memref<1x8x32xbf16, #tpu.memory_space<vmem>>, vector<1x8x32xbf16>
    %1 = vector.shape_cast %0 : vector<1x8x32xbf16> to vector<8x32xbf16>
    %c0_2 = arith.constant 0 : index
    %c0_3 = arith.constant 0 : index
    %2 = vector.load %arg3[%c0_2, %c0_3] : memref<32x96xbf16, #tpu.memory_space<vmem>>, vector<32x96xbf16>
    %cst = arith.constant dense<0.000000e+00> : vector<8x96xf32>
    %3 = tpu.matmul %1, %2, %cst {dimension_numbers = #tpu.dot_dimension_numbers<[1], [0], [0], [1], [0, 0, 1, 1], [], []>} : vector<8x32xbf16>, vector<32x96xbf16>, vector<8x96xf32> -> vector<8x96xf32>
    %4 = vector.extract_strided_slice %3 {offsets = [0, 0], sizes = [8, 32], strides = [1, 1]} : vector<8x96xf32> to vector<8x32xf32>
    %cst_4 = arith.constant 0.353553385 : f32
    %5 = vector.broadcast %cst_4 : f32 to vector<8x32xf32>
    %6 = arith.mulf %4, %5 : vector<8x32xf32>
    %7 = arith.truncf %6 : vector<8x32xf32> to vector<8x32xbf16>
    %c0_5 = arith.constant 0 : index
    %c0_6 = arith.constant 0 : index
    %c0_7 = arith.constant 0 : index
    %8 = vector.load %arg4[%c0_5, %c0_6, %c0_7] : memref<1x8x32xbf16, #tpu.memory_space<vmem>>, vector<1x8x32xbf16>
    %9 = vector.shape_cast %8 : vector<1x8x32xbf16> to vector<8x32xbf16>
    %10 = vector.shape_cast %7 : vector<8x32xbf16> to vector<1x8x32xbf16>
    tpu.vector_store %arg4[%c0_5, %c0_6, %c0_7], %10 {strides = array<i32>} : memref<1x8x32xbf16, #tpu.memory_space<vmem>>, vector<1x8x32xbf16>,
    %11 = vector.extract_strided_slice %3 {offsets = [0, 32], sizes = [8, 64], strides = [1, 1]} : vector<8x96xf32> to vector<8x64xf32>
    %12 = arith.truncf %11 : vector<8x64xf32> to vector<8x64xbf16>
    %c0_8 = arith.constant 0 : index
    %c0_9 = arith.constant 0 : index
    %c0_10 = arith.constant 0 : index
    %13 = vector.load %arg5[%c0_8, %c0_9, %c0_10] : memref<1x8x64xbf16, #tpu.memory_space<vmem>>, vector<1x8x64xbf16>
    %14 = vector.shape_cast %13 : vector<1x8x64xbf16> to vector<8x64xbf16>
    %15 = vector.shape_cast %12 : vector<8x64xbf16> to vector<1x8x64xbf16>
    tpu.vector_store %arg5[%c0_8, %c0_9, %c0_10], %15 {strides = array<i32>} : memref<1x8x64xbf16, #tpu.memory_space<vmem>>, vector<1x8x64xbf16>,
    return
  }
  func.func @transform_0(%arg0: i32, %arg1: i32) -> (i32, i32, i32) {
    %c0_i32 = arith.constant 0 : i32
    %c0_i32_0 = arith.constant 0 : i32
    return %arg0, %arg1, %c0_i32 : i32, i32, i32
  }
  func.func @transform_1(%arg0: i32, %arg1: i32) -> (i32, i32) {
    %c0_i32 = arith.constant 0 : i32
    %c0_i32_0 = arith.constant 0 : i32
    %c0_i32_1 = arith.constant 0 : i32
    return %c0_i32, %c0_i32_0 : i32, i32
  }
  func.func @transform_2(%arg0: i32, %arg1: i32) -> (i32, i32, i32) {
    %c0_i32 = arith.constant 0 : i32
    %c0_i32_0 = arith.constant 0 : i32
    return %arg0, %arg1, %c0_i32 : i32, i32, i32
  }
  func.func @transform_3(%arg0: i32, %arg1: i32) -> (i32, i32, i32) {
    %c0_i32 = arith.constant 0 : i32
    %c0_i32_0 = arith.constant 0 : i32
    return %arg0, %arg1, %c0_i32 : i32, i32, i32
  }
}

</mosaic_0001>

<llo_original>
// kernel: tpu_custom_call.1
$region0: #{tpu_custom_call.1}
  #allocation0 [shape = 'u32[]', space=smem, size = 0x4, offset = 0x4, fixed_abs, tag = 'smem constant byte address 0x4 - core index']
  #allocation1 [shape = 'u32[144,128]{1,0:T(1,128)}', space=vmem, size = 0x12000, scoped, tag = 'internal scratch']
  %s0 = inlined_call_operand.hbm [shape: bf16[2,8,32], index: 0, kind: input, shape index: {}]
  %s1 = inlined_call_operand.hbm [shape: bf16[32,96], index: 1, kind: input, shape index: {}]
  %s2 = inlined_call_operand.hbm [shape: bf16[2,8,32], index: 2, kind: output, shape index: {0}]
  %s3 = inlined_call_operand.hbm [shape: bf16[2,8,64], index: 3, kind: output, shape index: {1}]
  %4 = xla_tuple %s2, %s3
  %s5 = sld [smem:[#allocation0]]
  $region57: #{tpu_custom_call.1} parent=0
    _
  %s7 = ssub.s32 1, %s5
  %s8 = scalar_select 0, %s7, %s5
  $region1: #{tpu_custom_call.1} parent=0
    #allocation2 [shape = 'u8[4096]{0}', space=vmem, size = 0x1000, scoped, tag = 'input window, operand 0']
    #allocation3 [shape = 's32[2]{0}', space=sflag, size = 0x8, scoped, tag = 'scoped memory for tpu_custom_call.1']
    #allocation4 [shape = 's32[2]{0}', space=sflag, size = 0x8, scoped, tag = 'scoped memory for tpu_custom_call.1']
    #allocation5 [shape = 'u8[8192]{0}', space=vmem, size = 0x2000, scoped, tag = 'input window, operand 1, single buffered']
    #allocation6 [shape = 's32[1]{0}', space=sflag, size = 0x4, scoped, tag = 'scoped memory for tpu_custom_call.1']
    #allocation7 [shape = 'u8[4096]{0}', space=vmem, size = 0x1000, scoped, tag = 'output window, operand 0']
    #allocation8 [shape = 'u8[4096]{0}', space=vmem, size = 0x1000, scoped, tag = 'output window, operand 1']
    #allocation9 [shape = 's32[2]{0}', space=sflag, size = 0x8, scoped, tag = 'scoped memory for tpu_custom_call.1']
    %9 = vsyncpa [#allocation3], 0
    %s10 = scalar_lea.sflag [#allocation3], 1
    %11 = vsyncpa %s10, 0
    %12 = vsyncpa [#allocation6], 0
    %13 = vsyncpa [#allocation4], 0
    %s14 = scalar_lea.sflag [#allocation4], 1
    %15 = vsyncpa %s14, 0
    %16 = vsyncpa [#allocation9], 0
    %s17 = scalar_lea.sflag [#allocation9], 1
    %18 = vsyncpa %s17, 0
    loop: start=0, step=1, limit=4
    $region2: #{tpu_custom_call.1} parent=1 // loop_pre_header
      _
    $region3: #{tpu_custom_call.1} parent=1 // loop_header
      %s20 = sphi 0, %s24
      %p21 = scmp.ge.s32.totalorder %s20, 4
      %s27 = sphi 0, %s39
      %s28 = sphi 0, %s35
      %s29 = sphi 0, %s27
      %s30 = sphi 0, %s28
      %s31 = sphi 0, %s29
      %s32 = sphi 0, %s30
      %s44 = sphi 0, %s46
      %s47 = sphi 0, %s44
      %s48 = sphi 0, %s47
      %s64 = sphi 0, %s48
      %s68 = sphi 0, %s68
      %s70 = sphi 0, %s68
      %s71 = sphi 0, %s70
      %s85 = sphi 0, %s71
      %s93 = sphi 0, %s95
      %s96 = sphi 0, %s93
      %s97 = sphi 0, %s96
      %s113 = sphi 0, %s97
      %s121 = sphi 0, %s123
      %s124 = sphi 0, %s121
      %s125 = sphi 0, %s124
      %s141 = sphi 0, %s125
    $region4: #{tpu_custom_call.1} parent=1 // loop_header_branch
      %23 = sbr.rel (%p21) target = $region8
    $region5: #{tpu_custom_call.1} parent=1 // loop_body
      %s25 = ssub.s32 %s20, 1
      %s26 = ssub.s32 %s20, 2
      %s33 = sadd.s32 1, %s28
      %p34 = scmp.ge.s32.totalorder %s33, 1
      %s35 = scalar_select %p34, 0, %s33
      %s36 = sadd.s32 1, %s27
      %s37 = scalar_select %p34, %s36, %s27
      %p38 = scmp.ge.s32.totalorder %s37, 2
      %s39 = scalar_select %p38, 0, %s37
      %s40 = ssub.s32 %s27, %s39
      %s41 = ssub.s32 %s28, %s35
      %s42 = sor.u32 %s40, %s41
      %p43 = scmp.eq.s32.totalorder %s42, 0
      %s45 = sadd.s32 %s44, 1
      %s46 = scalar_select %p43, %s44, %s45
      %p49 = pneg %p43
      %p50 = scmp.eq.s32.totalorder %s20, 1
      %p51 = por %p49, %p50
      %p52 = scmp.ne.s32.totalorder %s44, %s47
      %p53 = scmp.eq.s32.totalorder %s20, 0
      %p54 = por %p52, %p53
      %p55 = scmp.ne.s32.totalorder %s44, %s47
      %p56 = scmp.eq.s32.totalorder %s25, 1
      %p57 = por %p55, %p56
      %p58 = scmp.ne.s32.totalorder %s47, %s48
      %p59 = scmp.eq.s32.totalorder %s25, 0
      %p60 = por %p58, %p59
      %p61 = scmp.ne.s32.totalorder %s47, %s48
      %p62 = scmp.eq.s32.totalorder %s26, 1
      %p63 = por %p61, %p62
      %p65 = scmp.ne.s32.totalorder %s48, %s64
      %p66 = scmp.eq.s32.totalorder %s26, 0
      %p67 = por %p65, %p66
      %s69 = sadd.s32 %s68, 1
      %p72 = scmp.eq.s32.totalorder %s20, 1
      %p73 = scmp.ne.s32.totalorder %s68, %s70
      %p74 = scmp.eq.s32.totalorder %s20, 0
      %p75 = por %p73, %p74
      %p76 = scmp.ne.s32.totalorder %s68, %s70
      %p77 = scmp.eq.s32.totalorder %s25, 1
      %p78 = por %p76, %p77
      %p79 = scmp.ne.s32.totalorder %s70, %s71
      %p80 = scmp.eq.s32.totalorder %s25, 0
      %p81 = por %p79, %p80
      %p82 = scmp.ne.s32.totalorder %s70, %s71
      %p83 = scmp.eq.s32.totalorder %s26, 1
      %p84 = por %p82, %p83
      %p86 = scmp.ne.s32.totalorder %s71, %s85
      %p87 = scmp.eq.s32.totalorder %s26, 0
      %p88 = por %p86, %p87
      %s89 = ssub.s32 %s27, %s39
      %s90 = ssub.s32 %s28, %s35
      %s91 = sor.u32 %s89, %s90
      %p92 = scmp.eq.s32.totalorder %s91, 0
      %s94 = sadd.s32 %s93, 1
      %s95 = scalar_select %p92, %s93, %s94
      %p98 = pneg %p92
      %p99 = scmp.eq.s32.totalorder %s20, 1
      %p100 = por %p98, %p99
      %p101 = scmp.ne.s32.totalorder %s93, %s96
      %p102 = scmp.eq.s32.totalorder %s20, 0
      %p103 = por %p101, %p102
      %p104 = scmp.ne.s32.totalorder %s93, %s96
      %p105 = scmp.eq.s32.totalorder %s25, 1
      %p106 = por %p104, %p105
      %p107 = scmp.ne.s32.totalorder %s96, %s97
      %p108 = scmp.eq.s32.totalorder %s25, 0
      %p109 = por %p107, %p108
      %p110 = scmp.ne.s32.totalorder %s96, %s97
      %p111 = scmp.eq.s32.totalorder %s26, 1
      %p112 = por %p110, %p111
      %p114 = scmp.ne.s32.totalorder %s97, %s113
      %p115 = scmp.eq.s32.totalorder %s26, 0
      %p116 = por %p114, %p115
      %s117 = ssub.s32 %s27, %s39
      %s118 = ssub.s32 %s28, %s35
      %s119 = sor.u32 %s117, %s118
      %p120 = scmp.eq.s32.totalorder %s119, 0
      %s122 = sadd.s32 %s121, 1
      %s123 = scalar_select %p120, %s121, %s122
      %p126 = pneg %p120
      %p127 = scmp.eq.s32.totalorder %s20, 1
      %p128 = por %p126, %p127
      %p129 = scmp.ne.s32.totalorder %s121, %s124
      %p130 = scmp.eq.s32.totalorder %s20, 0
      %p131 = por %p129, %p130
      %p132 = scmp.ne.s32.totalorder %s121, %s124
      %p133 = scmp.eq.s32.totalorder %s25, 1
      %p134 = por %p132, %p133
      %p135 = scmp.ne.s32.totalorder %s124, %s125
      %p136 = scmp.eq.s32.totalorder %s25, 0
      %p137 = por %p135, %p136
      %p138 = scmp.ne.s32.totalorder %s124, %s125
      %p139 = scmp.eq.s32.totalorder %s26, 1
      %p140 = por %p138, %p139
      %p142 = scmp.ne.s32.totalorder %s125, %s141
      %p143 = scmp.eq.s32.totalorder %s26, 0
      %p144 = por %p142, %p143
      %p145 = scmp.le.s32.totalorder 1, %s20
      %p146 = scmp.lt.s32.totalorder %s20, 3
      %p147 = pnand %p145, %p146
      %p148 = pneg %p147
      // Predicated region
      $region9: #{tpu_custom_call.1} parent=5 // pred_check
        _
      $region10: #{tpu_custom_call.1} parent=5 // pred_check_branch
        %150 = sbr.rel (%p147) target = $region12
      $region11: #{tpu_custom_call.1} parent=5 // pred_region
        %s151 = ssub.s32 %s20, 1
        // Predicated region
        $region13: #{tpu_custom_call.1} parent=11 // pred_check
          %p152 = pneg %p81
        $region14: #{tpu_custom_call.1} parent=11 // pred_check_branch
          %154 = sbr.rel (%p152) target = $region16
        $region15: #{tpu_custom_call.1} parent=11 // pred_region
          %s156 = ssub.s32 256, 256
          %157 = vsyncadd [#allocation6], %s156
          %s158 = sshll.u32 [#allocation5], 4
          %s159 = int_to_ptr.vmem [resolvable:$true] %s158
          %164 = dma.hbm_to_vmem [thread:$0]  %s1, 256, %s159, [#allocation6], 64, 64, 4
        $region16: #{tpu_custom_call.1} parent=11 // pred_fallthru
          _
      $region12: #{tpu_custom_call.1} parent=5 // pred_fallthru
        _
      %p165 = scmp.lt.s32.totalorder %s20, 2
      // Predicated region
      $region17: #{tpu_custom_call.1} parent=5 // pred_check
        %p166 = pneg %p165
      $region18: #{tpu_custom_call.1} parent=5 // pred_check_branch
        %168 = sbr.rel (%p166) target = $region20
      $region19: #{tpu_custom_call.1} parent=5 // pred_region
        // Predicated region
        $region21: #{tpu_custom_call.1} parent=19 // pred_check
          %p169 = pneg %p54
        $region22: #{tpu_custom_call.1} parent=19 // pred_check_branch
          %171 = sbr.rel (%p169) target = $region24
        $region23: #{tpu_custom_call.1} parent=19 // pred_region
          %s172 = sand.u32 %s44, 1
          %s173 = scalar_lea.sflag [#allocation3], %s172
          %s174 = sand.u32 %s44, 1
          %s175 = smul.addr %s174, 4
          %s176 = scalar_lea.vmem [#allocation2], %s175
          %s178 = ssub.s32 64, 64
          %179 = vsyncadd %s173, %s178
          %s180 = sadd.s32 %s28, %s27
          %s181 = smul.addr %s180, 64
          %s182 = scalar_lea.hbm %s0, %s181
          %s184 = sshll.u32 %s176, 4
          %s185 = int_to_ptr.vmem [resolvable:$true] %s184
          %187 = dma.hbm_to_vmem [thread:$0]  %s182, 64, %s185, %s173
        $region24: #{tpu_custom_call.1} parent=19 // pred_fallthru
          _
      $region20: #{tpu_custom_call.1} parent=5 // pred_fallthru
        _
      %p188 = scmp.le.s32.totalorder 1, %s20
      %p189 = scmp.lt.s32.totalorder %s20, 3
      %p190 = pnand %p188, %p189
      %p191 = pneg %p190
      // Predicated region
      $region25: #{tpu_custom_call.1} parent=5 // pred_check
        _
      $region26: #{tpu_custom_call.1} parent=5 // pred_check_branch
        %193 = sbr.rel (%p190) target = $region28
      $region27: #{tpu_custom_call.1} parent=5 // pred_region
        %s194 = ssub.s32 %s20, 1
        %s195 = sand.u32 %s47, 1
        %s196 = scalar_lea.sflag [#allocation3], %s195
        %s197 = sand.u32 %s47, 1
        %s198 = smul.addr %s197, 4
        %s199 = scalar_lea.vmem [#allocation2], %s198
        // Predicated region
        $region29: #{tpu_custom_call.1} parent=27 // pred_check
          %p200 = pneg %p60
        $region30: #{tpu_custom_call.1} parent=27 // pred_check_branch
          %202 = sbr.rel (%p200) target = $region32
        $region31: #{tpu_custom_call.1} parent=27 // pred_region
          %203 = dma.done %s196, 64
        $region32: #{tpu_custom_call.1} parent=27 // pred_fallthru
          _
        // Predicated region
        $region33: #{tpu_custom_call.1} parent=27 // pred_check
          %p204 = pneg %p81
        $region34: #{tpu_custom_call.1} parent=27 // pred_check_branch
          %206 = sbr.rel (%p204) target = $region36
        $region35: #{tpu_custom_call.1} parent=27 // pred_region
          %207 = dma.done [#allocation6], 256
        $region36: #{tpu_custom_call.1} parent=27 // pred_fallthru
          _
        %s208 = sand.u32 %s47, 1
        %s209 = scalar_lea.sflag [#allocation3], %s208
        %s210 = sand.u32 %s47, 1
        %s211 = smul.addr %s210, 4
        %s212 = scalar_lea.vmem [#allocation2], %s211
        %p213 = pneg %p60
        %p214 = pneg %p57
        %p215 = pneg %p81
        %p216 = pneg %p78
        %p217 = pneg %p109
        %p218 = pneg %p106
        %s219 = sand.u32 %s96, 1
        %s220 = scalar_lea.sflag [#allocation4], %s219
        %s221 = sand.u32 %s96, 1
        %s222 = smul.addr %s221, 4
        %s223 = scalar_lea.vmem [#allocation7], %s222
        %p224 = pneg %p137
        %p225 = pneg %p134
        %s226 = sand.u32 %s124, 1
        %s227 = scalar_lea.sflag [#allocation9], %s226
        %s228 = sand.u32 %s124, 1
        %s229 = smul.addr %s228, 4
        %s230 = scalar_lea.vmem [#allocation8], %s229
        %v232 = vld [vmem:[%s199] sm:$0xf]
        %v233 = vld [vmem:[#allocation5] sm:$0xf]
        %v234 = vld [vmem:[#allocation5 + $0x4] sm:$0xf]
        %v235 = vld [vmem:[#allocation5 + $0x8] sm:$0xf]
        %v236 = vld [vmem:[#allocation5 + $0xc] sm:$0xf]
        %v241 = vunpack.c.l.b16 %v233
        %v242 = vunpack.c.l.b16 %v234
        %v243 = vunpack.c.l.b16 %v235
        %v244 = vunpack.c.l.b16 %v236
        %v245 = vpack.c.b16 %v242, %v241
        %v246 = vpack.c.b16 %v244, %v243
        %vm249 = vcmask 261120
        %v251 = vsel %vm249, %v232, 0
        %253 = vmatprep.subr.bf16.mxu0 0
        %254 = vmatpush1.bf16.msra.mxu0 0
        %255 = vmatprep.subr.bf16.mxu0 0
        %256 = vmatpush1.bf16.msra.mxu0 0
        %257 = vmatprep.subr.bf16.mxu0 0
        %258 = vmatpush1.bf16.msra.mxu0 0
        %259 = vmatprep.subr.bf16.mxu0 0
        %260 = vmatpush1.bf16.msra.mxu0 0
        %261 = vmatprep.subr.bf16.mxu0 0
        %262 = vmatpush1.bf16.msra.mxu0 0
        %263 = vmatprep.subr.bf16.mxu0 0
        %264 = vmatpush1.bf16.msra.mxu0 0
        %265 = vmatprep.subr.bf16.mxu0 0
        %266 = vmatpush1.bf16.msra.mxu0 %v246
        %267 = vmatprep.subr.bf16.mxu0 0
        %268 = vmatpush1.bf16.msra.mxu0 %v245
        %269 = vmatprep.subr.bf16.mxu0 0
        %270 = vmatpush2.bf16.msra.mxu0 0
        %271 = vmatprep.subr.bf16.mxu0 0
        %272 = vmatpush2.bf16.msra.mxu0 0
        %273 = vmatprep.subr.bf16.mxu0 0
        %274 = vmatpush2.bf16.msra.mxu0 0
        %275 = vmatprep.subr.bf16.mxu0 0
        %276 = vmatpush2.bf16.msra.mxu0 0
        %277 = vmatprep.subr.bf16.mxu0 0
        %278 = vmatpush2.bf16.msra.mxu0 0
        %279 = vmatprep.subr.bf16.mxu0 0
        %280 = vmatpush2.bf16.msra.mxu0 0
        %281 = vmatprep.subr.bf16.mxu0 0
        %282 = vmatpush2.bf16.msra.mxu0 0
        %283 = vmatprep.subr.bf16.mxu0 0
        %284 = vmatpush2.bf16.msra.mxu0 0
        %285 = vmatprep.mubr.bf16.mxu0 0
        %286 = vmatmul.mubr.bf16.gmra.mxu0 %v251
        %v287 = vpop.f32.mrf.mxu0
        %v288 = vadd.f32 0.0, %v287
        %v289 = vpop.f32.mrf.mxu0
        %v290 = vpop.f32.mrf.mxu0
        %v291 = vpop.f32.mrf.mxu0
        %292 = vdwg.mxu0
        %v293 = vmul.f32 %v288, 0.35355338
        %v294 = vpack.c.bf16 %v293, %v293
        %vm295 = vcmask 257024
        %296 = vst.msk [vmem:[%s223] sm:$0xf] %vm295, %v294
        %v297 = vpack.c.bf16 %v288, %v288
        %v299 = vunpack.c.l.b16 %v297
        %v300 = vpack.c.b16 %v299, %v299
        %301 = vrot.lane.b32.xlu0 %v300, 96
        %v302 = vpop.permute.xlu0 %301
        %vm304 = vcmask 519168
        %305 = vst.msk [vmem:[%s230] sm:$0xf] %vm304, %v302
        %s306 = sand.u32 %s96, 1
        %s307 = scalar_lea.sflag [#allocation4], %s306
        %s308 = sand.u32 %s96, 1
        %s309 = smul.addr %s308, 4
        %s310 = scalar_lea.vmem [#allocation7], %s309
        %s311 = sand.u32 %s124, 1
        %s312 = scalar_lea.sflag [#allocation9], %s311
        %s313 = sand.u32 %s124, 1
        %s314 = smul.addr %s313, 4
        %s315 = scalar_lea.vmem [#allocation8], %s314
        // Predicated region
        $region37: #{tpu_custom_call.1} parent=27 // pred_check
          %p316 = pneg %p106
        $region38: #{tpu_custom_call.1} parent=27 // pred_check_branch
          %318 = sbr.rel (%p316) target = $region40
        $region39: #{tpu_custom_call.1} parent=27 // pred_region
          %s320 = ssub.s32 64, 64
          %321 = vsyncadd %s307, %s320
          %s322 = sadd.s32 %s30, %s29
          %s323 = smul.addr %s322, 64
          %s324 = scalar_lea.hbm %s2, %s323
          %s326 = sshll.u32 %s310, 4
          %s327 = int_to_ptr.vmem [resolvable:$true] %s326
          %329 = dma.vmem_to_hbm [thread:$0]  %s327, 64, %s324, %s307
        $region40: #{tpu_custom_call.1} parent=27 // pred_fallthru
          _
        // Predicated region
        $region41: #{tpu_custom_call.1} parent=27 // pred_check
          %p330 = pneg %p134
        $region42: #{tpu_custom_call.1} parent=27 // pred_check_branch
          %332 = sbr.rel (%p330) target = $region44
        $region43: #{tpu_custom_call.1} parent=27 // pred_region
          %s334 = ssub.s32 64, 64
          %335 = vsyncadd %s312, %s334
          %s336 = sadd.s32 %s30, %s29
          %s337 = smul.addr %s336, 64
          %s338 = scalar_lea.hbm %s3, %s337
          %s340 = sshll.u32 %s315, 4
          %s341 = int_to_ptr.vmem [resolvable:$true] %s340
          %343 = dma.vmem_to_hbm [thread:$0]  %s341, 64, %s338, %s312
        $region44: #{tpu_custom_call.1} parent=27 // pred_fallthru
          _
      $region28: #{tpu_custom_call.1} parent=5 // pred_fallthru
        _
      %p344 = scmp.le.s32.totalorder 2, %s20
      // Predicated region
      $region45: #{tpu_custom_call.1} parent=5 // pred_check
        %p345 = pneg %p344
      $region46: #{tpu_custom_call.1} parent=5 // pred_check_branch
        %347 = sbr.rel (%p345) target = $region48
      $region47: #{tpu_custom_call.1} parent=5 // pred_region
        %s348 = ssub.s32 %s20, 2
        // Predicated region
        $region49: #{tpu_custom_call.1} parent=47 // pred_check
          %p349 = pneg %p112
        $region50: #{tpu_custom_call.1} parent=47 // pred_check_branch
          %351 = sbr.rel (%p349) target = $region52
        $region51: #{tpu_custom_call.1} parent=47 // pred_region
          %s352 = sand.u32 %s97, 1
          %s353 = scalar_lea.sflag [#allocation4], %s352
          %s354 = sand.u32 %s97, 1
          %s355 = smul.addr %s354, 4
          %s356 = scalar_lea.vmem [#allocation7], %s355
          %357 = dma.done %s353, 64
        $region52: #{tpu_custom_call.1} parent=47 // pred_fallthru
          _
        // Predicated region
        $region53: #{tpu_custom_call.1} parent=47 // pred_check
          %p358 = pneg %p140
        $region54: #{tpu_custom_call.1} parent=47 // pred_check_branch
          %360 = sbr.rel (%p358) target = $region56
        $region55: #{tpu_custom_call.1} parent=47 // pred_region
          %s361 = sand.u32 %s125, 1
          %s362 = scalar_lea.sflag [#allocation9], %s361
          %s363 = sand.u32 %s125, 1
          %s364 = smul.addr %s363, 4
          %s365 = scalar_lea.vmem [#allocation8], %s364
          %366 = dma.done %s362, 64
        $region56: #{tpu_custom_call.1} parent=47 // pred_fallthru
          _
      $region48: #{tpu_custom_call.1} parent=5 // pred_fallthru
        _
    $region6: #{tpu_custom_call.1} parent=1 // loop_footer
      %s24 = sadd.s32 1, %s20
    $region7: #{tpu_custom_call.1} parent=1 // loop_footer_branch
      %19 = sbr.rel target = $region3
    $region8: #{tpu_custom_call.1} parent=1 // loop_exit
      _
    %367 = vsyncpa [#allocation3], 1
    %s368 = scalar_lea.sflag [#allocation3], 1
    %369 = vsyncpa %s368, 1
    %370 = vsyncpa [#allocation6], 1
    %371 = vsyncpa [#allocation4], 1
    %s372 = scalar_lea.sflag [#allocation4], 1
    %373 = vsyncpa %s372, 1
    %374 = vsyncpa [#allocation9], 1
    %s375 = scalar_lea.sflag [#allocation9], 1
    %376 = vsyncpa %s375, 1

</llo_original>
